<compile_context>
chip_gen: v5e
topology: v5e:2x2
jax: 0.10.0
libtpu: 0.0.40
codegen_flags: <defaults>
</compile_context>

<pallas_src>
import math

import jax
import jax.numpy as jnp
from jax.experimental import pallas as pl
from jax.experimental.pallas import tpu as pltpu


def _round_up(x, m):
    return (x + m - 1) // m * m


def _cdiv(a, b):
    return (a + b - 1) // b


_SQRT_HALF = 1.0 / math.sqrt(2.0)


# ----------------------------------------------------------------------------
# Kernel body
# ----------------------------------------------------------------------------
def _make_mlp_kernel(th, resident_weights, acc_in_out):
    """Build the kernel for one (tm, th) slab of fc1 -> GELU -> fc2.

    Grid = (M tiles, H tiles); the hidden axis is the innermost ("arbitrary")
    reduction axis and the output block index is constant across it, so the
    f32 accumulator (the output block itself when acc_in_out, else a VMEM
    scratch) stays resident in VMEM.
    """

    def kernel(x_ref, w1_ref, b1_ref, w2_ref, b2_ref, o_ref, *scratch):
        j = pl.program_id(1)  # hidden (reduction) tile index
        acc_ref = o_ref if acc_in_out else scratch[0]

        @pl.when(j == 0)
        def _init():
            acc_ref[...] = jnp.zeros_like(acc_ref)

        if resident_weights:
            # Weights are fully VMEM-resident; slice the current H tile here.
            off = pl.multiple_of(j * th, 128)
            w1 = w1_ref[:, pl.ds(off, th)]
            b1 = b1_ref[:, pl.ds(off, th)]
            w2 = w2_ref[pl.ds(off, th), :]
        else:
            w1 = w1_ref[...]
            b1 = b1_ref[...]
            w2 = w2_ref[...]

        # fc1 partial: (tm, C_in) @ (C_in, th), f32 accumulation on the MXU.
        h = jnp.dot(x_ref[...], w1, preferred_element_type=jnp.float32)
        h = h + b1  # bias kept in f32

        # Exact (erf) GELU in f32 — matches torch.nn.GELU default.
        h = 0.5 * h * (1.0 + jax.lax.erf(h * jnp.float32(_SQRT_HALF)))

        # Dropout(p=0.0) is identity -> nothing to do.

        # fc2 partial product for this H tile, accumulated in f32.
        acc_ref[...] += jnp.dot(h.astype(w2.dtype), w2,
                                preferred_element_type=jnp.float32)

        @pl.when(j == pl.num_programs(1) - 1)
        def _finalize():
            if acc_in_out:
                o_ref[...] = o_ref[...] + b2_ref[...]
            else:
                o_ref[...] = (acc_ref[...] + b2_ref[...]).astype(o_ref.dtype)

    return kernel


# ----------------------------------------------------------------------------
# Tile / residency selection
# ----------------------------------------------------------------------------
def _vmem_capacity_bytes():
    try:
        return int(pltpu.get_tpu_info().vmem_capacity_bytes)
    except Exception:
        return 64 * 1024 * 1024  # conservative: v7x per-TensorCore VMEM


def _estimate_vmem_bytes(tm, th, H_pad, C_in_pad, C_out_pad,
                         s_cd, s_out, resident, acc_in_out):
    """Conservative VMEM estimate: count 2x (double buffers) for every block."""
    x_blk = 2 * tm * C_in_pad * s_cd
    out_blk = 2 * tm * C_out_pad * s_out
    if resident:
        w_bytes = 2 * (C_in_pad * H_pad + H_pad * C_out_pad) * s_cd
        b_bytes = 2 * (H_pad + C_out_pad) * 4
    else:
        w_bytes = 2 * (C_in_pad * th + th * C_out_pad) * s_cd
        b_bytes = 2 * (th + C_out_pad) * 4
    acc = 0 if acc_in_out else tm * C_out_pad * 4
    hidden = 2 * tm * th * 4  # GELU intermediate / staging
    return x_blk + out_blk + w_bytes + b_bytes + acc + hidden


def _select_config(M, H, C_in_pad, C_out_pad, s_cd, s_out, acc_in_out,
                   tile_m, tile_h, vmem_budget, resident_options):
    # Hidden (reduction) tiling without quantization waste.
    nh = max(1, _cdiv(H, tile_h))
    th = _round_up(_cdiv(H, nh), 128)
    H_pad = th * nh

    M8 = _round_up(max(M, 1), 8)

    # v7x megacore: give the "parallel" M axis >= 2 tiles when M is large enough
    # that splitting does not hurt arithmetic intensity much (one TC idles otherwise).
    if _cdiv(M8, tile_m) == 1 and M >= 256:
        tile_m = _round_up(_cdiv(M8, 2), 8)

    cands = sorted({c for c in (tile_m, 1024, 512, 256, 128, 64, 32, 16, 8)
                    if 0 < c <= tile_m}, reverse=True)

    def fit(th_, H_pad_):
        for c in cands:
            nm = _cdiv(M8, c)
            tm = _round_up(_cdiv(M8, nm), 8)  # M_pad - M < tm (no ~2x row waste)
            for resident in resident_options:
                if _estimate_vmem_bytes(tm, th_, H_pad_, C_in_pad, C_out_pad,
                                        s_cd, s_out, resident,
                                        acc_in_out) <= vmem_budget:
                    return tm, nm, resident
        return None

    got = None
    while True:
        got = fit(th, H_pad)
        if got is not None or th <= 128:
            break
        nh *= 2  # shrink the hidden tile and retry
        th = _round_up(_cdiv(H, nh), 128)
        H_pad = th * nh

    if got is None:  # last resort: smallest row tile, streaming weights
        nm = _cdiv(M8, 8)
        tm = 8
        resident = False
    else:
        tm, nm, resident = got
    return tm, nm, th, nh, H_pad, resident


# ----------------------------------------------------------------------------
# Public wrapper
# ----------------------------------------------------------------------------
def mlp_pallas(x, w1, b1, w2, b2, *, compute_dtype="auto",
               tile_m=512, tile_h=1024, vmem_limit_bytes=None,
               weights_resident=None):
    """x: (..., C_in); w1: (C_in, H); b1: (H,); w2: (H, C_out); b2: (C_out,).

    Weights are stored transposed ((in, out)) relative to PyTorch's (out, in).

    compute_dtype:
      "auto"       -> bf16 operands + f32 accumulation when x is f32 (fast MXU path)
      jnp.float32  -> bit-exact f32 matmuls
      other dtype  -> explicit operand dtype (accumulation always f32)
    weights_resident: None = auto (based on VMEM budget), True/False to force.
    """
    *lead, C_in = x.shape
    H = w1.shape[1]
    C_out = w2.shape[1]
    M = 1
    for d in lead:
        M *= d
    M = max(M, 1)

    out_dtype = x.dtype
    if compute_dtype == "auto":
        cd = jnp.bfloat16 if x.dtype == jnp.float32 else x.dtype
    elif compute_dtype is None:
        cd = x.dtype
    else:
        cd = jnp.dtype(compute_dtype)
    s_cd = jnp.dtype(cd).itemsize
    s_out = jnp.dtype(out_dtype).itemsize

    C_in_pad = _round_up(C_in, 128)
    C_out_pad = _round_up(C_out, 128)

    # f32 output -> accumulate directly into the (VMEM-resident) output block.
    acc_in_out = out_dtype == jnp.float32

    vmem_cap = _vmem_capacity_bytes()
    if vmem_limit_bytes is None:
        vmem_limit_bytes = min(int(0.9 * vmem_cap), 100 * 1024 * 1024)
    vmem_budget = int(0.85 * vmem_limit_bytes)

    if weights_resident is None:
        resident_options = (True, False)
    else:
        resident_options = (bool(weights_resident),)

    tm, nm, th, nh, H_pad, resident = _select_config(
        M, H, C_in_pad, C_out_pad, s_cd, s_out, acc_in_out,
        tile_m, tile_h, vmem_budget, resident_options)
    M_pad = tm * nm

    # ---- prepare operands (skip pad / cast when already aligned) -----------
    x2d = x.reshape(M, C_in)
    if x2d.dtype != cd:
        x2d = x2d.astype(cd)
    if (M_pad, C_in_pad) != (M, C_in):
        x2d = jnp.pad(x2d, ((0, M_pad - M), (0, C_in_pad - C_in)))

    w1p = w1 if w1.dtype == cd else w1.astype(cd)
    if w1p.shape != (C_in_pad, H_pad):
        w1p = jnp.pad(w1p, ((0, C_in_pad - C_in), (0, H_pad - H)))
    w2p = w2 if w2.dtype == cd else w2.astype(cd)
    if w2p.shape != (H_pad, C_out_pad):
        w2p = jnp.pad(w2p, ((0, H_pad - H), (0, C_out_pad - C_out)))

    b1p = b1.astype(jnp.float32)
    if b1p.shape[0] != H_pad:
        b1p = jnp.pad(b1p, (0, H_pad - H))
    b1p = b1p.reshape(1, H_pad)
    b2p = b2.astype(jnp.float32)
    if b2p.shape[0] != C_out_pad:
        b2p = jnp.pad(b2p, (0, C_out_pad - C_out))
    b2p = b2p.reshape(1, C_out_pad)

    grid = (nm, nh)

    if resident:
        # Constant index maps -> W1/W2/biases DMA into VMEM exactly once.
        in_specs = [
            pl.BlockSpec((tm, C_in_pad), lambda i, j: (i, 0)),       # x rows
            pl.BlockSpec((C_in_pad, H_pad), lambda i, j: (0, 0)),    # W1 (resident)
            pl.BlockSpec((1, H_pad), lambda i, j: (0, 0)),           # b1 (resident)
            pl.BlockSpec((H_pad, C_out_pad), lambda i, j: (0, 0)),   # W2 (resident)
            pl.BlockSpec((1, C_out_pad), lambda i, j: (0, 0)),       # b2
        ]
    else:
        in_specs = [
            pl.BlockSpec((tm, C_in_pad), lambda i, j: (i, 0)),       # x rows
            pl.BlockSpec((C_in_pad, th), lambda i, j: (0, j)),       # W1 col slab
            pl.BlockSpec((1, th), lambda i, j: (0, j)),              # b1 slab
            pl.BlockSpec((th, C_out_pad), lambda i, j: (j, 0)),      # W2 row slab
            pl.BlockSpec((1, C_out_pad), lambda i, j: (0, 0)),       # b2
        ]

    scratch_shapes = [] if acc_in_out else [pltpu.VMEM((tm, C_out_pad), jnp.float32)]

    kernel = _make_mlp_kernel(th, resident, acc_in_out)

    flops = 2 * M_pad * H_pad * (C_in_pad + C_out_pad)
    weight_bytes = (C_in_pad * H_pad + H_pad * C_out_pad) * s_cd
    bytes_accessed = (M_pad * C_in_pad * s_cd + M_pad * C_out_pad * s_out
                      + weight_bytes * (1 if resident else nm)
                      + (H_pad + C_out_pad) * 4)
    cost = pl.CostEstimate(flops=int(flops),
                           transcendentals=int(M_pad * H_pad),
                           bytes_accessed=int(bytes_accessed))

    out2d = pl.pallas_call(
        kernel,
        out_shape=jax.ShapeDtypeStruct((M_pad, C_out_pad), out_dtype),
        grid_spec=pltpu.PrefetchScalarGridSpec(
            num_scalar_prefetch=0,
            grid=grid,
            in_specs=in_specs,
            out_specs=pl.BlockSpec((tm, C_out_pad), lambda i, j: (i, 0)),
            scratch_shapes=scratch_shapes,
        ),
        compiler_params=pltpu.CompilerParams(
            dimension_semantics=("parallel", "arbitrary"),
            vmem_limit_bytes=int(vmem_limit_bytes),
        ),
        cost_estimate=cost,
    )(x2d, w1p, b1p, w2p, b2p)

    out2d = out2d[:M, :C_out]
    return out2d.reshape(*lead, C_out)


def init_params(key, in_features, hidden_features, out_features, dtype=jnp.float32):
    """Deterministic init mimicking nn.Linear's default (uniform +/- 1/sqrt(fan_in))."""
    k1, k2, k3, k4 = jax.random.split(key, 4)
    bound1 = 1.0 / math.sqrt(in_features)
    bound2 = 1.0 / math.sqrt(hidden_features)
    # stored as (in, out) == PyTorch weight.T
    w1 = jax.random.uniform(k1, (in_features, hidden_features), dtype, -bound1, bound1)
    b1 = jax.random.uniform(k2, (hidden_features,), dtype, -bound1, bound1)
    w2 = jax.random.uniform(k3, (hidden_features, out_features), dtype, -bound2, bound2)
    b2 = jax.random.uniform(k4, (out_features,), dtype, -bound2, bound2)
    return w1, b1, w2, b2


def _gelu_ref(h):
    return 0.5 * h * (1.0 + jax.lax.erf(h / jnp.sqrt(2.0)))


if __name__ == "__main__":
    # Small shapes consistent with the module: token tensor (B, N, C_in).
    B, N = 2, 8
    in_features = 32
    hidden_features = 64
    out_features = 32  # defaults to in_features in the module

    key = jax.random.PRNGKey(0)
    kx, kp, kp2 = jax.random.split(key, 3)
    x = jax.random.normal(kx, (B, N, in_features), dtype=jnp.float32)
    w1, b1, w2, b2 = init_params(kp, in_features, hidden_features, out_features)

    # Plain-JAX reference (exact GELU), same semantics as the PyTorch forward.
    ref = _gelu_ref(x @ w1 + b1) @ w2 + b2

    # 1) f32 path (bit-for-bit semantics), resident-weights configuration.
    out_f32 = jax.block_until_ready(
        mlp_pallas(x, w1, b1, w2, b2, compute_dtype=jnp.float32))
    assert out_f32.shape == ref.shape
    assert jnp.allclose(out_f32, ref, atol=1e-4, rtol=1e-4), "f32 mismatch vs reference"

    # 2) Default path: bf16 operands, f32 accumulation (v5e/v6e/v7x MXU recipe).
    out_def = jax.block_until_ready(mlp_pallas(x, w1, b1, w2, b2))
    assert jnp.allclose(out_def, ref, atol=5e-2, rtol=5e-2), "bf16 mismatch vs reference"

    # 3) Streaming-weights fallback + multi-tile grid (forces the H-reduction
    #    accumulation across grid steps and >1 row tile).
    w1b, b1b, w2b, b2b = init_params(kp2, in_features, 256, out_features)
    ref_big = _gelu_ref(x @ w1b + b1b) @ w2b + b2b
    out_stream = jax.block_until_ready(
        mlp_pallas(x, w1b, b1b, w2b, b2b, compute_dtype=jnp.float32,
                   tile_m=8, tile_h=128, weights_resident=False))
    assert jnp.allclose(out_stream, ref_big, atol=1e-4, rtol=1e-4), \
        "streaming-path mismatch vs reference"

    # 4) Sub-f32 output path (bf16 in/out) -> exercises the scratch accumulator.
    out_bf16io = jax.block_until_ready(
        mlp_pallas(x.astype(jnp.bfloat16), w1, b1, w2, b2))
    assert jnp.allclose(out_bf16io.astype(jnp.float32), ref, atol=1e-1, rtol=1e-1), \
        "bf16-io mismatch vs reference"

    print("KERNEL_OK")
</pallas_src>

<mosaic_0001>
module attributes {stable_mosaic.version = 11 : i64} {
  func.func @kernel(%arg0: i32, %arg1: i32, %arg2: memref<16x128xf32, #tpu.memory_space<vmem>>, %arg3: memref<128x128xf32, #tpu.memory_space<vmem>>, %arg4: memref<1x128xf32, #tpu.memory_space<vmem>>, %arg5: memref<128x128xf32, #tpu.memory_space<vmem>>, %arg6: memref<1x128xf32, #tpu.memory_space<vmem>>, %arg7: memref<16x128xf32, #tpu.memory_space<vmem>>) attributes {dimension_semantics = [#tpu.dimension_semantics<parallel>, #tpu.dimension_semantics<arbitrary>], iteration_bounds = array<i64: 1, 1>, scalar_prefetch = 0 : i64, scratch_operands = 0 : i64, tpu.core_type = #tpu.core_type<tc>, window_params = [{transform_indices = @transform_0, window_bounds = array<i64: 16, 128>}, {pipeline_mode = #tpu.pipeline_mode<synchronous>, transform_indices = @transform_1, window_bounds = array<i64: 128, 128>}, {pipeline_mode = #tpu.pipeline_mode<synchronous>, transform_indices = @transform_2, window_bounds = array<i64: 1, 128>}, {pipeline_mode = #tpu.pipeline_mode<synchronous>, transform_indices = @transform_3, window_bounds = array<i64: 128, 128>}, {pipeline_mode = #tpu.pipeline_mode<synchronous>, transform_indices = @transform_4, window_bounds = array<i64: 1, 128>}, {transform_indices = @transform_5, window_bounds = array<i64: 16, 128>}]} {
    %c0_i32 = arith.constant 0 : i32
    %0 = arith.cmpi eq, %arg1, %c0_i32 : i32
    %1 = arith.extui %0 : i1 to i32
    %c0_i32_0 = arith.constant 0 : i32
    %2 = arith.cmpi ne, %1, %c0_i32_0 : i32
    scf.if %2 {
      %cst_15 = arith.constant 0.000000e+00 : f32
      %30 = vector.broadcast %cst_15 : f32 to vector<16x128xf32>
      %c0_16 = arith.constant 0 : index
      %c0_17 = arith.constant 0 : index
      %31 = vector.load %arg7[%c0_16, %c0_17] : memref<16x128xf32, #tpu.memory_space<vmem>>, vector<16x128xf32>
      tpu.vector_store %arg7[%c0_16, %c0_17], %30 {strides = array<i32>} : memref<16x128xf32, #tpu.memory_space<vmem>>, vector<16x128xf32>,
    } else {
    }
    %c128_i32 = arith.constant 128 : i32
    %3 = arith.muli %arg1, %c128_i32 : i32
    %4 = tpu.assume_multiple %3, 128 : i32
    %c0 = arith.constant 0 : index
    %5 = arith.index_cast %4 : i32 to index
    %6 = vector.load %arg3[%c0, %5] : memref<128x128xf32, #tpu.memory_space<vmem>>, vector<128x128xf32>
    %c0_1 = arith.constant 0 : index
    %7 = arith.index_cast %4 : i32 to index
    %8 = vector.load %arg4[%c0_1, %7] : memref<1x128xf32, #tpu.memory_space<vmem>>, vector<1x128xf32>
    %9 = arith.index_cast %4 : i32 to index
    %c0_2 = arith.constant 0 : index
    %10 = vector.load %arg5[%9, %c0_2] : memref<128x128xf32, #tpu.memory_space<vmem>>, vector<128x128xf32>
    %c0_3 = arith.constant 0 : index
    %c0_4 = arith.constant 0 : index
    %11 = vector.load %arg2[%c0_3, %c0_4] : memref<16x128xf32, #tpu.memory_space<vmem>>, vector<16x128xf32>
    %cst = arith.constant dense<0.000000e+00> : vector<16x128xf32>
    %12 = tpu.matmul %11, %6, %cst {dimension_numbers = #tpu.dot_dimension_numbers<[1], [0], [0], [1], [0, 0, 1, 1], [], []>} : vector<16x128xf32>, vector<128x128xf32>, vector<16x128xf32> -> vector<16x128xf32>
    %13 = vector.broadcast %8 : vector<1x128xf32> to vector<16x128xf32>
    %14 = arith.addf %12, %13 : vector<16x128xf32>
    %cst_5 = arith.constant 5.000000e-01 : f32
    %15 = vector.broadcast %cst_5 : f32 to vector<16x128xf32>
    %16 = arith.mulf %15, %14 : vector<16x128xf32>
    %cst_6 = arith.constant 0.707106769 : f32
    %17 = vector.broadcast %cst_6 : f32 to vector<16x128xf32>
    %18 = arith.mulf %14, %17 : vector<16x128xf32>
    %19 = math.erf %18 : vector<16x128xf32>
    %cst_7 = arith.constant 1.000000e+00 : f32
    %20 = vector.broadcast %cst_7 : f32 to vector<16x128xf32>
    %21 = arith.addf %20, %19 : vector<16x128xf32>
    %22 = arith.mulf %16, %21 : vector<16x128xf32>
    %c0_8 = arith.constant 0 : index
    %c0_9 = arith.constant 0 : index
    %23 = vector.load %arg7[%c0_8, %c0_9] : memref<16x128xf32, #tpu.memory_space<vmem>>, vector<16x128xf32>
    %cst_10 = arith.constant dense<0.000000e+00> : vector<16x128xf32>
    %24 = tpu.matmul %22, %10, %cst_10 {dimension_numbers = #tpu.dot_dimension_numbers<[1], [0], [0], [1], [0, 0, 1, 1], [], []>} : vector<16x128xf32>, vector<128x128xf32>, vector<16x128xf32> -> vector<16x128xf32>
    %25 = arith.addf %23, %24 : vector<16x128xf32>
    %c0_11 = arith.constant 0 : index
    %c0_12 = arith.constant 0 : index
    %26 = vector.load %arg7[%c0_11, %c0_12] : memref<16x128xf32, #tpu.memory_space<vmem>>, vector<16x128xf32>
    tpu.vector_store %arg7[%c0_11, %c0_12], %25 {strides = array<i32>} : memref<16x128xf32, #tpu.memory_space<vmem>>, vector<16x128xf32>,
    %c0_i32_13 = arith.constant 0 : i32
    %27 = arith.cmpi eq, %arg1, %c0_i32_13 : i32
    %28 = arith.extui %27 : i1 to i32
    %c0_i32_14 = arith.constant 0 : i32
    %29 = arith.cmpi ne, %28, %c0_i32_14 : i32
    scf.if %29 {
      %c0_15 = arith.constant 0 : index
      %c0_16 = arith.constant 0 : index
      %30 = vector.load %arg7[%c0_15, %c0_16] : memref<16x128xf32, #tpu.memory_space<vmem>>, vector<16x128xf32>
      %c0_17 = arith.constant 0 : index
      %c0_18 = arith.constant 0 : index
      %31 = vector.load %arg6[%c0_17, %c0_18] : memref<1x128xf32, #tpu.memory_space<vmem>>, vector<1x128xf32>
      %32 = vector.broadcast %31 : vector<1x128xf32> to vector<16x128xf32>
      %33 = arith.addf %30, %32 : vector<16x128xf32>
      %c0_19 = arith.constant 0 : index
      %c0_20 = arith.constant 0 : index
      %34 = vector.load %arg7[%c0_19, %c0_20] : memref<16x128xf32, #tpu.memory_space<vmem>>, vector<16x128xf32>
      tpu.vector_store %arg7[%c0_19, %c0_20], %33 {strides = array<i32>} : memref<16x128xf32, #tpu.memory_space<vmem>>, vector<16x128xf32>,
    } else {
    }
    return
  }
  func.func @transform_0(%arg0: i32, %arg1: i32) -> (i32, i32) {
    %c0_i32 = arith.constant 0 : i32
    %c0_i32_0 = arith.constant 0 : i32
    return %arg0, %c0_i32 : i32, i32
  }
  func.func @transform_1(%arg0: i32, %arg1: i32) -> (i32, i32) {
    %c0_i32 = arith.constant 0 : i32
    %c0_i32_0 = arith.constant 0 : i32
    %c0_i32_1 = arith.constant 0 : i32
    return %c0_i32, %c0_i32_0 : i32, i32
  }
  func.func @transform_2(%arg0: i32, %arg1: i32) -> (i32, i32) {
    %c0_i32 = arith.constant 0 : i32
    %c0_i32_0 = arith.constant 0 : i32
    %c0_i32_1 = arith.constant 0 : i32
    return %c0_i32, %c0_i32_0 : i32, i32
  }
  func.func @transform_3(%arg0: i32, %arg1: i32) -> (i32, i32) {
    %c0_i32 = arith.constant 0 : i32
    %c0_i32_0 = arith.constant 0 : i32
    %c0_i32_1 = arith.constant 0 : i32
    return %c0_i32, %c0_i32_0 : i32, i32
  }
  func.func @transform_4(%arg0: i32, %arg1: i32) -> (i32, i32) {
    %c0_i32 = arith.constant 0 : i32
    %c0_i32_0 = arith.constant 0 : i32
    %c0_i32_1 = arith.constant 0 : i32
    return %c0_i32, %c0_i32_0 : i32, i32
  }
  func.func @transform_5(%arg0: i32, %arg1: i32) -> (i32, i32) {
    %c0_i32 = arith.constant 0 : i32
    %c0_i32_0 = arith.constant 0 : i32
    return %arg0, %c0_i32 : i32, i32
  }
}

</mosaic_0001>

<llo_original>
// kernel: tpu_custom_call.1
$region0: #{tpu_custom_call.1}
  #allocation0 [shape = 'u32[]', space=smem, size = 0x4, offset = 0x4, fixed_abs, tag = 'smem constant byte address 0x4 - core index']
  #allocation1 [shape = 'u32[72,128]{1,0:T(1,128)}', space=vmem, size = 0x9000, scoped, tag = 'internal scratch']
  %s0 = inlined_call_operand.hbm [shape: f32[16,128], index: 0, kind: input, shape index: {}]
  %s1 = inlined_call_operand.hbm [shape: f32[128,128], index: 1, kind: input, shape index: {}]
  %s2 = inlined_call_operand.vmem [shape: f32[1,128], index: 2, kind: input, shape index: {}]
  %s3 = inlined_call_operand.hbm [shape: f32[128,128], index: 3, kind: input, shape index: {}]
  %s4 = inlined_call_operand.vmem [shape: f32[1,128], index: 4, kind: input, shape index: {}]
  %s5 = inlined_call_operand.hbm [shape: f32[16,128], index: 5, kind: output, shape index: {}]
  %s6 = sld [smem:[#allocation0]]
  $region50: #{tpu_custom_call.1} parent=0
    _
  %s8 = ssub.s32 1, %s6
  %s9 = scalar_select 0, %s8, %s6
  $region1: #{tpu_custom_call.1} parent=0
    #allocation2 [shape = 'u8[8192]{0}', space=vmem, size = 0x2000, scoped, tag = 'input window, operand 0, single buffered']
    #allocation3 [shape = 's32[1]{0}', space=sflag, size = 0x4, scoped, tag = 'scoped memory for tpu_custom_call.1']
    #allocation4 [shape = 's32[1]{0}', space=sflag, size = 0x4, scoped, tag = 'scoped memory for tpu_custom_call.1']
    #allocation5 [shape = 'u8[65536]{0}', space=vmem, size = 0x10000, scoped, tag = 'input window, operand 1, single buffered']
    #allocation6 [shape = 's32[1]{0}', space=sflag, size = 0x4, scoped, tag = 'scoped memory for tpu_custom_call.1']
    #allocation7 [shape = 'u8[65536]{0}', space=vmem, size = 0x10000, scoped, tag = 'input window, operand 3, single buffered']
    #allocation8 [shape = 'u8[8192]{0}', space=vmem, size = 0x2000, scoped, tag = 'output window, operand 0, single buffered']
    %10 = vsyncpa [#allocation3], 0
    %11 = vsyncpa [#allocation6], 0
    %12 = vsyncpa [#allocation4], 0
    // Predicated region
    $region2: #{tpu_custom_call.1} parent=1 // pred_check
      _
    $region3: #{tpu_custom_call.1} parent=1 // pred_check_branch
      %14 = sbr.rel (0) target = $region5
    $region4: #{tpu_custom_call.1} parent=1 // pred_region
      %16 = vsyncadd [#allocation3], 0
      %s17 = sshll.u32 %s0, 4
      %s18 = int_to_ptr.hbm [resolvable:$true] %s17
      %s19 = sshll.u32 [#allocation2], 4
      %s20 = int_to_ptr.vmem [resolvable:$true] %s19
      %25 = dma.hbm_to_vmem [thread:$0]  %s18, 256, %s20, [#allocation3], 128, 128, 8
    $region5: #{tpu_custom_call.1} parent=1 // pred_fallthru
      _
    // Predicated region
    $region6: #{tpu_custom_call.1} parent=1 // pred_check
      _
    $region7: #{tpu_custom_call.1} parent=1 // pred_check_branch
      %27 = sbr.rel (0) target = $region9
    $region8: #{tpu_custom_call.1} parent=1 // pred_region
      %29 = vsyncadd [#allocation6], 0
      %s30 = sshll.u32 %s1, 4
      %s31 = int_to_ptr.hbm [resolvable:$true] %s30
      %s32 = sshll.u32 [#allocation5], 4
      %s33 = int_to_ptr.vmem [resolvable:$true] %s32
      %38 = dma.hbm_to_vmem [thread:$0]  %s31, 2048, %s33, [#allocation6], 128, 128, 8
    $region9: #{tpu_custom_call.1} parent=1 // pred_fallthru
      _
    // Predicated region
    $region10: #{tpu_custom_call.1} parent=1 // pred_check
      _
    $region11: #{tpu_custom_call.1} parent=1 // pred_check_branch
      %40 = sbr.rel (0) target = $region13
    $region12: #{tpu_custom_call.1} parent=1 // pred_region
      _
    $region13: #{tpu_custom_call.1} parent=1 // pred_fallthru
      _
    // Predicated region
    $region14: #{tpu_custom_call.1} parent=1 // pred_check
      _
    $region15: #{tpu_custom_call.1} parent=1 // pred_check_branch
      %42 = sbr.rel (0) target = $region17
    $region16: #{tpu_custom_call.1} parent=1 // pred_region
      %44 = vsyncadd [#allocation6], 0
      %s45 = sshll.u32 %s3, 4
      %s46 = int_to_ptr.hbm [resolvable:$true] %s45
      %s47 = sshll.u32 [#allocation7], 4
      %s48 = int_to_ptr.vmem [resolvable:$true] %s47
      %53 = dma.hbm_to_vmem [thread:$0]  %s46, 2048, %s48, [#allocation6], 128, 128, 8
    $region17: #{tpu_custom_call.1} parent=1 // pred_fallthru
      _
    // Predicated region
    $region18: #{tpu_custom_call.1} parent=1 // pred_check
      _
    $region19: #{tpu_custom_call.1} parent=1 // pred_check_branch
      %55 = sbr.rel (0) target = $region21
    $region20: #{tpu_custom_call.1} parent=1 // pred_region
      _
    $region21: #{tpu_custom_call.1} parent=1 // pred_fallthru
      _
    // Predicated region
    $region22: #{tpu_custom_call.1} parent=1 // pred_check
      _
    $region23: #{tpu_custom_call.1} parent=1 // pred_check_branch
      %57 = sbr.rel (0) target = $region25
    $region24: #{tpu_custom_call.1} parent=1 // pred_region
      %59 = dma.done [#allocation3], 256
    $region25: #{tpu_custom_call.1} parent=1 // pred_fallthru
      _
    // Predicated region
    $region26: #{tpu_custom_call.1} parent=1 // pred_check
      _
    $region27: #{tpu_custom_call.1} parent=1 // pred_check_branch
      %61 = sbr.rel (0) target = $region29
    $region28: #{tpu_custom_call.1} parent=1 // pred_region
      %63 = dma.done [#allocation6], 2048
    $region29: #{tpu_custom_call.1} parent=1 // pred_fallthru
      _
    // Predicated region
    $region30: #{tpu_custom_call.1} parent=1 // pred_check
      _
    $region31: #{tpu_custom_call.1} parent=1 // pred_check_branch
      %65 = sbr.rel (0) target = $region33
    $region32: #{tpu_custom_call.1} parent=1 // pred_region
      %67 = dma.done [#allocation6], 2048
    $region33: #{tpu_custom_call.1} parent=1 // pred_fallthru
      _
    %p68 = scmp.eq.s32.totalorder 0, 0
    // Predicated region
    $region34: #{tpu_custom_call.1} parent=1 // pred_check
      %p69 = pneg %p68
    $region35: #{tpu_custom_call.1} parent=1 // pred_check_branch
      %71 = sbr.rel (%p69) target = $region37
    $region36: #{tpu_custom_call.1} parent=1 // pred_region
      %72 = vst [vmem:[#allocation8] sm:$0xff] 0.0
      %73 = vst [vmem:[#allocation8 + $0x8] sm:$0xff] 0.0
    $region37: #{tpu_custom_call.1} parent=1 // pred_fallthru
      _
    %s74 = smul.u32 0, 128
    %s75 = sshra.s32 %s74, 7
    %s76 = sand.u32 %s74, 127
    %s77 = scalar_lea.vmem [#allocation5], %s75
    %v78 = vld [vmem:[%s77] sm:$0xff]
    %v79 = vld [vmem:[%s77 + $0x8] sm:$0xff]
    %v80 = vld [vmem:[%s77 + $0x10] sm:$0xff]
    %v81 = vld [vmem:[%s77 + $0x18] sm:$0xff]
    %v82 = vld [vmem:[%s77 + $0x20] sm:$0xff]
    %v83 = vld [vmem:[%s77 + $0x28] sm:$0xff]
    %v84 = vld [vmem:[%s77 + $0x30] sm:$0xff]
    %v85 = vld [vmem:[%s77 + $0x38] sm:$0xff]
    %v86 = vld [vmem:[%s77 + $0x40] sm:$0xff]
    %v87 = vld [vmem:[%s77 + $0x48] sm:$0xff]
    %v88 = vld [vmem:[%s77 + $0x50] sm:$0xff]
    %v89 = vld [vmem:[%s77 + $0x58] sm:$0xff]
    %v90 = vld [vmem:[%s77 + $0x60] sm:$0xff]
    %v91 = vld [vmem:[%s77 + $0x68] sm:$0xff]
    %v92 = vld [vmem:[%s77 + $0x70] sm:$0xff]
    %v93 = vld [vmem:[%s77 + $0x78] sm:$0xff]
    %s94 = scalar_lea.vmem %s2, %s75
    %v95 = vld [vmem:[%s94] sm:$0x1]
    %s96 = scalar_lea.vmem [#allocation7], %s74
    %v97 = vld [vmem:[%s96] sm:$0xff]
    %v98 = vld [vmem:[%s96 + $0x8] sm:$0xff]
    %v99 = vld [vmem:[%s96 + $0x10] sm:$0xff]
    %v100 = vld [vmem:[%s96 + $0x18] sm:$0xff]
    %v101 = vld [vmem:[%s96 + $0x20] sm:$0xff]
    %v102 = vld [vmem:[%s96 + $0x28] sm:$0xff]
    %v103 = vld [vmem:[%s96 + $0x30] sm:$0xff]
    %v104 = vld [vmem:[%s96 + $0x38] sm:$0xff]
    %v105 = vld [vmem:[%s96 + $0x40] sm:$0xff]
    %v106 = vld [vmem:[%s96 + $0x48] sm:$0xff]
    %v107 = vld [vmem:[%s96 + $0x50] sm:$0xff]
    %v108 = vld [vmem:[%s96 + $0x58] sm:$0xff]
    %v109 = vld [vmem:[%s96 + $0x60] sm:$0xff]
    %v110 = vld [vmem:[%s96 + $0x68] sm:$0xff]
    %v111 = vld [vmem:[%s96 + $0x70] sm:$0xff]
    %v112 = vld [vmem:[%s96 + $0x78] sm:$0xff]
    %v113 = vld [vmem:[#allocation2] sm:$0xff]
    %v114 = vld [vmem:[#allocation2 + $0x8] sm:$0xff]
    %v116 = vperm.slane %v95, 0
    %118 = vmatpush.msra.mxu0 %v93
    %119 = vmatpush.msra.mxu0 %v92
    %120 = vmatpush.msra.mxu0 %v91
    %121 = vmatpush.msra.mxu0 %v90
    %122 = vmatpush.msra.mxu0 %v89
    %123 = vmatpush.msra.mxu0 %v88
    %124 = vmatpush.msra.mxu0 %v87
    %125 = vmatpush.msra.mxu0 %v86
    %126 = vmatpush.msra.mxu0 %v85
    %127 = vmatpush.msra.mxu0 %v84
    %128 = vmatpush.msra.mxu0 %v83
    %129 = vmatpush.msra.mxu0 %v82
    %130 = vmatpush.msra.mxu0 %v81
    %131 = vmatpush.msra.mxu0 %v80
    %132 = vmatpush.msra.mxu0 %v79
    %133 = vmatpush.msra.mxu0 %v78
    %134 = vmatmul.f32.gmra.mxu0 %v113
    %v135 = vpop.f32.mrf.mxu0
    %v136 = vadd.f32 %v116, %v135
    %137 = vmatmul.f32.gmra.mxu0 %v114
    %v138 = vpop.f32.mrf.mxu0
    %v139 = vadd.f32 %v116, %v138
    %140 = vdwg.mxu0
    %v141 = vmul.f32 %v136, 0.5
    %v142 = vmul.f32 %v139, 0.5
    %v143 = vmul.f32 %v136, 0.70710677
    %v144 = vmul.f32 %v139, 0.70710677
    %v145 = vmul.f32 %v143, %v143
    %v146 = vmin.f32 16.0, %v145
    %v147 = vmul.f32 %v146, 2.1237322e-06
    %v148 = vadd.f32 %v147, 0.00028619796
    %v149 = vmul.f32 %v146, %v148
    %v150 = vadd.f32 %v149, 0.0036580483
    %v151 = vmul.f32 %v146, %v150
    %v152 = vadd.f32 %v151, 0.05243302
    %v153 = vmul.f32 %v146, %v152
    %v154 = vadd.f32 %v153, 0.18741608
    %v155 = vmul.f32 %v146, %v154
    %v156 = vadd.f32 %v155, 1.1283791
    %v157 = vmul.f32 %v143, %v156
    %v158 = vmul.f32 %v146, 3.8918573e-05
    %v159 = vadd.f32 %v158, 0.001143296
    %v160 = vmul.f32 %v146, %v159
    %v161 = vadd.f32 %v160, 0.014752088
    %v162 = vmul.f32 %v146, %v161
    %v163 = vadd.f32 %v162, 0.112945676
    %v164 = vmul.f32 %v146, %v163
    %v165 = vadd.f32 %v164, 0.4994258
    %v166 = vmul.f32 %v146, %v165
    %v167 = vadd.f32 %v166, 1.0
    %v168 = vrcp.pop %v167
    %v169 = vmul.f32 %v167, %v168
    %v170 = vsub.f32 1.0, %v169
    %v171 = vmul.f32 %v168, %v170
    %v172 = vadd.f32 %v168, %v171
    %vm173 = vweird.f32 %v167
    %vm174 = vweird.f32 %v168
    %vm175 = vmor %vm173, %vm174
    %v176 = vsel %vm175, %v168, %v172
    %v177 = vand.u32 2147483647, %v167
    %vm178 = vcmp.eq.f32.partialorder %v177, 8.507059e+37
    %v179 = vand.u32 %v167, 2147483648
    %v180 = vor.u32 1.1754944e-38, %v179
    %v181 = vsel %vm178, %v180, %v176
    %v182 = vmul.f32 %v157, %v181
    %v183 = vmin.f32 %v182, 1.0
    %v184 = vmax.f32 %v183, -1.0
    %v185 = vmul.f32 %v144, %v144
    %v186 = vmin.f32 16.0, %v185
    %v187 = vmul.f32 %v186, 2.1237322e-06
    %v188 = vadd.f32 %v187, 0.00028619796
    %v189 = vmul.f32 %v186, %v188
    %v190 = vadd.f32 %v189, 0.0036580483
    %v191 = vmul.f32 %v186, %v190
    %v192 = vadd.f32 %v191, 0.05243302
    %v193 = vmul.f32 %v186, %v192
    %v194 = vadd.f32 %v193, 0.18741608
    %v195 = vmul.f32 %v186, %v194
    %v196 = vadd.f32 %v195, 1.1283791
    %v197 = vmul.f32 %v144, %v196
    %v198 = vmul.f32 %v186, 3.8918573e-05
    %v199 = vadd.f32 %v198, 0.001143296
    %v200 = vmul.f32 %v186, %v199
    %v201 = vadd.f32 %v200, 0.014752088
    %v202 = vmul.f32 %v186, %v201
    %v203 = vadd.f32 %v202, 0.112945676
    %v204 = vmul.f32 %v186, %v203
    %v205 = vadd.f32 %v204, 0.4994258
    %v206 = vmul.f32 %v186, %v205
    %v207 = vadd.f32 %v206, 1.0
    %v208 = vrcp.pop %v207
    %v209 = vmul.f32 %v207, %v208
    %v210 = vsub.f32 1.0, %v209
    %v211 = vmul.f32 %v208, %v210
    %v212 = vadd.f32 %v208, %v211
    %vm213 = vweird.f32 %v207
    %vm214 = vweird.f32 %v208
    %vm215 = vmor %vm213, %vm214
    %v216 = vsel %vm215, %v208, %v212
    %v217 = vand.u32 2147483647, %v207
    %vm218 = vcmp.eq.f32.partialorder %v217, 8.507059e+37
    %v219 = vand.u32 %v207, 2147483648
    %v220 = vor.u32 1.1754944e-38, %v219
    %v221 = vsel %vm218, %v220, %v216
    %v222 = vmul.f32 %v197, %v221
    %v223 = vmin.f32 %v222, 1.0
    %v224 = vmax.f32 %v223, -1.0
    %v225 = vadd.f32 %v184, 1.0
    %v226 = vadd.f32 %v224, 1.0
    %v227 = vmul.f32 %v141, %v225
    %v228 = vmul.f32 %v142, %v226
    %v229 = vld [vmem:[#allocation8] sm:$0xff]
    %v230 = vld [vmem:[#allocation8 + $0x8] sm:$0xff]
    %231 = vmatpush.msra.mxu0 %v112
    %232 = vmatpush.msra.mxu0 %v111
    %233 = vmatpush.msra.mxu0 %v110
    %234 = vmatpush.msra.mxu0 %v109
    %235 = vmatpush.msra.mxu0 %v108
    %236 = vmatpush.msra.mxu0 %v107
    %237 = vmatpush.msra.mxu0 %v106
    %238 = vmatpush.msra.mxu0 %v105
    %239 = vmatpush.msra.mxu0 %v104
    %240 = vmatpush.msra.mxu0 %v103
    %241 = vmatpush.msra.mxu0 %v102
    %242 = vmatpush.msra.mxu0 %v101
    %243 = vmatpush.msra.mxu0 %v100
    %244 = vmatpush.msra.mxu0 %v99
    %245 = vmatpush.msra.mxu0 %v98
    %246 = vmatpush.msra.mxu0 %v97
    %247 = vmatmul.f32.gmra.mxu0 %v227
    %v248 = vpop.f32.mrf.mxu0
    %v249 = vadd.f32 0.0, %v248
    %250 = vmatmul.f32.gmra.mxu0 %v228
    %v251 = vpop.f32.mrf.mxu0
    %v252 = vadd.f32 0.0, %v251
    %253 = vdwg.mxu0
    %v254 = vadd.f32 %v229, %v249
    %v255 = vadd.f32 %v230, %v252
    %256 = vst [vmem:[#allocation8] sm:$0xff] %v254
    %257 = vst [vmem:[#allocation8 + $0x8] sm:$0xff] %v255
    // Predicated region
    $region38: #{tpu_custom_call.1} parent=1 // pred_check
      %p258 = pneg %p68
    $region39: #{tpu_custom_call.1} parent=1 // pred_check_branch
      %260 = sbr.rel (%p258) target = $region41
    $region40: #{tpu_custom_call.1} parent=1 // pred_region
      %v261 = vld [vmem:[#allocation8] sm:$0xff]
      %v262 = vld [vmem:[#allocation8 + $0x8] sm:$0xff]
      %v263 = vld [vmem:[%s4] sm:$0x1]
      %v265 = vperm.slane %v263, 0
      %v267 = vadd.f32 %v261, %v265
      %v268 = vadd.f32 %v262, %v265
      %269 = vst [vmem:[#allocation8] sm:$0xff] %v267
      %270 = vst [vmem:[#allocation8 + $0x8] sm:$0xff] %v268
    $region41: #{tpu_custom_call.1} parent=1 // pred_fallthru
      _
    // Predicated region
    $region42: #{tpu_custom_call.1} parent=1 // pred_check
      _
    $region43: #{tpu_custom_call.1} parent=1 // pred_check_branch
      %272 = sbr.rel (0) target = $region45
    $region44: #{tpu_custom_call.1} parent=1 // pred_region
      %274 = vsyncadd [#allocation4], 0
      %s275 = sshll.u32 [#allocation8], 4
      %s276 = int_to_ptr.vmem [resolvable:$true] %s275
      %s277 = sshll.u32 %s5, 4
      %s278 = int_to_ptr.hbm [resolvable:$true] %s277
      %283 = dma.vmem_to_hbm [thread:$0]  %s276, 256, %s278, [#allocation4], 128, 128, 8
    $region45: #{tpu_custom_call.1} parent=1 // pred_fallthru
      _
    // Predicated region
    $region46: #{tpu_custom_call.1} parent=1 // pred_check
      _
    $region47: #{tpu_custom_call.1} parent=1 // pred_check_branch
      %285 = sbr.rel (0) target = $region49
    $region48: #{tpu_custom_call.1} parent=1 // pred_region
      %287 = dma.done [#allocation4], 256
    $region49: #{tpu_custom_call.1} parent=1 // pred_fallthru
      _
    %288 = vsyncpa [#allocation3], 1
    %289 = vsyncpa [#allocation6], 1
    %290 = vsyncpa [#allocation4], 1

</llo_original>
